<compile_context>
chip_gen: v7x
topology: tpu7x:2x2x1
jax: 0.10.0
libtpu: 0.0.40
codegen_flags: <defaults>
</compile_context>

<pallas_src>
import jax
import jax.numpy as jnp
from jax.experimental import pallas as pl
from jax.experimental.pallas import tpu as pltpu


def _decoder_step_kernel(
    last_node_ref,   # SMEM (B,)         int32  last selected node per batch row
    h_flat_hbm,      # ANY  (B*N, H)     f32    node embeddings, left in HBM
    gru_h_ref,       # VMEM (L, B, H)    f32    incoming hidden (aliased to new_h out)
    mask_ref,        # VMEM (B, N)       f32    1.0 = masked, 0.0 = keep
    e_ref,           # VMEM (B, N, H)    f32    precomputed reference projection
    w_gru_ref,       # VMEM (L, 2H, Gp)  rows [0:H]=W_ih^T, [H:2H]=W_hh^T (r,z,n; lane-padded)
    b_gru_ref,       # VMEM (L, 2, Gp)   [l,0]=b_ih, [l,1]=b_hh (lane-padded)
    w_q_ref,         # VMEM (H, H)       W_q^T
    bqv_ref,         # VMEM (2, H)       [0]=b_q, [1]=v
    probs_ref,       # out VMEM (B, N)
    new_h_ref,       # out VMEM (L, B, H)
    x_buf,           # scratch VMEM (B, H)
    gather_sem,      # scratch DMA semaphores (B,)
):
    B, N = probs_ref.shape
    H = x_buf.shape[1]

    # ---- DMA-side gather: x_buf[b] = h_n[b, last_node[b], :] -------------------
    # h_n never leaves HBM; only B rows are moved.  pl.loop keeps trace size
    # constant in B (no python unrolling, no concatenate).
    def _row_copy(b):
        row = last_node_ref[b] + b * N
        return pltpu.make_async_copy(h_flat_hbm.at[row], x_buf.at[b], gather_sem.at[b])

    @pl.loop(0, B)
    def _start(b):
        _row_copy(b).start()

    @pl.loop(0, B)
    def _wait(b):
        _row_copy(b).wait()

    x = x_buf[...]                                                   # (B, H) f32

    # ---- 2-layer GRU cell (torch gate order r, z, n), fused per-path matmuls ----
    mm_dtype = w_gru_ref.dtype      # bf16 on v6e/v7x if requested; elementwise stays f32

    def gru_cell(x_in, h_in, layer):
        gi = jnp.dot(x_in.astype(mm_dtype), w_gru_ref[layer, 0:H, :],
                     preferred_element_type=jnp.float32) + b_gru_ref[layer, 0]
        gh = jnp.dot(h_in.astype(mm_dtype), w_gru_ref[layer, H:2 * H, :],
                     preferred_element_type=jnp.float32) + b_gru_ref[layer, 1]
        r = jax.nn.sigmoid(gi[:, 0:H] + gh[:, 0:H])
        z = jax.nn.sigmoid(gi[:, H:2 * H] + gh[:, H:2 * H])
        n = jnp.tanh(gi[:, 2 * H:3 * H] + r * gh[:, 2 * H:3 * H])
        return (1.0 - z) * n + z * h_in

    h0_new = gru_cell(x, gru_h_ref[0], 0)
    h1_new = gru_cell(h0_new, gru_h_ref[1], 1)
    new_h_ref[0] = h0_new.astype(new_h_ref.dtype)
    new_h_ref[1] = h1_new.astype(new_h_ref.dtype)

    # ---- pointer attention (AttentionDecoder, use_tanh=True, C=10) -------------
    q = jnp.dot(h1_new.astype(w_q_ref.dtype), w_q_ref[...],
                preferred_element_type=jnp.float32) + bqv_ref[0]                 # (B, H)
    v_row = bqv_ref[1:2, :]                                                      # (1, H)
    # e_ref already holds h_n @ W_ref^T + b_ref (step-invariant, hoisted).
    u = jnp.sum(v_row * jnp.tanh(q[:, None, :] + e_ref[...]), axis=-1)           # (B, N)

    # ---- additive mask + softmax(dim=1) + clamp(min=1e-8) ----------------------
    # masked_fill(-inf) -> additive -1e30: identical softmax for rows with at
    # least one unmasked node; fully-masked rows give uniform probs (not NaN).
    logits = 10.0 * jnp.tanh(u) + mask_ref[...] * jnp.float32(-1e30)
    m = jnp.max(logits, axis=1, keepdims=True)
    ex = jnp.exp(logits - m)
    inv_den = pl.reciprocal(jnp.sum(ex, axis=1, keepdims=True), approx=False)
    probs_ref[...] = jnp.maximum(ex * inv_den, 1e-8).astype(probs_ref.dtype)


# ------------------------------------------------------------------------------
# Wrapper API: pack once at init, precompute once per sequence, step per decode.
# ------------------------------------------------------------------------------
def pack_decoder_params(params, matmul_dtype=jnp.float32):
    """Pack/transpose all decoder weights ONCE at init (hoisted from the step path).

    matmul_dtype=jnp.bfloat16 is recommended on v6e/v7x at production sizes
    (halves weight DMA/VMEM, full-rate MXU); elementwise math stays f32 either way.
    """
    H = params["w_q"].shape[0]
    G = 3 * H
    Gp = ((G + 127) // 128) * 128            # pad packed gate dim to a lane multiple

    def pad2(w_t):                            # (H, 3H) -> (H, Gp)
        return jnp.pad(w_t, ((0, 0), (0, Gp - G)))

    def pad1(b):                              # (3H,) -> (Gp,)
        return jnp.pad(b, (0, Gp - G))

    w_gru = jnp.stack([
        jnp.concatenate([pad2(params["w_ih0"].T), pad2(params["w_hh0"].T)], axis=0),
        jnp.concatenate([pad2(params["w_ih1"].T), pad2(params["w_hh1"].T)], axis=0),
    ]).astype(matmul_dtype)                                                    # (L, 2H, Gp)
    b_gru = jnp.stack([
        jnp.stack([pad1(params["b_ih0"]), pad1(params["b_hh0"])]),
        jnp.stack([pad1(params["b_ih1"]), pad1(params["b_hh1"])]),
    ]).astype(jnp.float32)                                                     # (L, 2, Gp)

    return {
        "w_gru": w_gru,
        "b_gru": b_gru,
        "w_q_t": params["w_q"].T.astype(matmul_dtype),                         # (H, H)
        "bqv": jnp.stack([params["b_q"], params["v"]]).astype(jnp.float32),    # (2, H)
        "w_ref_mat": params["w_ref"].reshape(H, H).astype(jnp.float32),        # conv1x1 weight
        "b_ref": params["b_ref"].astype(jnp.float32),
    }


def precompute_reference(packed, h_n):
    """ONCE per decode sequence: the step-invariant pointer 'reference' projection
    e = Conv1d_1x1(h_n), plus the flattened embedding table the kernel gathers from."""
    B, N, H = h_n.shape
    e_proj = jnp.einsum("bnh,dh->bnd", h_n, packed["w_ref_mat"]) + packed["b_ref"]
    h_flat = h_n.reshape(B * N, H).astype(jnp.float32)
    return h_flat, e_proj.astype(jnp.float32)


@jax.jit
def sequential_decoder_supervised_step(packed, h_flat, e_proj, last_node, gru_hidden, mask):
    """One decode step == SequencialDecoderSupervised.forward (returns probs, new gru_hidden)."""
    B, N, _ = e_proj.shape
    L, _, H = gru_hidden.shape
    assert L == 2, "gru_num_layers=2 as in the module default"

    smem = pl.BlockSpec(memory_space=pltpu.MemorySpace.SMEM)
    vmem = pl.BlockSpec(memory_space=pltpu.MemorySpace.VMEM)
    hbm = pl.BlockSpec(memory_space=pl.ANY)

    probs, new_h = pl.pallas_call(
        _decoder_step_kernel,
        out_shape=(
            jax.ShapeDtypeStruct((B, N), jnp.float32),
            jax.ShapeDtypeStruct((L, B, H), jnp.float32),
        ),
        in_specs=[smem, hbm, vmem, vmem, vmem, vmem, vmem, vmem, vmem],
        out_specs=(vmem, vmem),
        scratch_shapes=[
            pltpu.VMEM((B, H), jnp.float32),        # gathered last-node embeddings
            pltpu.SemaphoreType.DMA((B,)),          # one sem per gather DMA
        ],
        # gru_hidden (input 2) aliases new_h (output 1): no fresh HBM buffer per step.
        input_output_aliases={2: 1},
    )(
        last_node.reshape(B).astype(jnp.int32),
        h_flat,
        gru_hidden.astype(jnp.float32),
        mask.astype(jnp.float32),
        e_proj,
        packed["w_gru"], packed["b_gru"], packed["w_q_t"], packed["bqv"],
    )
    return probs, new_h


def sequential_decoder_supervised(params, h_n, last_node, gru_hidden, mask):
    """Convenience one-shot wrapper with the original module signature.  For decode
    loops, call pack_decoder_params once, precompute_reference once per sequence,
    and sequential_decoder_supervised_step per step."""
    packed = pack_decoder_params(params)
    h_flat, e_proj = precompute_reference(packed, h_n)
    return sequential_decoder_supervised_step(packed, h_flat, e_proj, last_node, gru_hidden, mask)


# ------------------------------------------------------------------------------
# Plain-JAX reference mirroring the PyTorch forward semantics.
# ------------------------------------------------------------------------------
def _reference(params, h_n, last_node, gru_hidden, mask):
    B, N, H = h_n.shape
    x = h_n[jnp.arange(B), last_node[:, 0]]            # (B, H)

    def gru_layer(x_in, h_in, w_ih, w_hh, b_ih, b_hh):
        gi = x_in @ w_ih.T + b_ih
        gh = h_in @ w_hh.T + b_hh
        i_r, i_z, i_n = jnp.split(gi, 3, axis=1)
        h_r, h_z, h_nn = jnp.split(gh, 3, axis=1)
        r = jax.nn.sigmoid(i_r + h_r)
        z = jax.nn.sigmoid(i_z + h_z)
        n = jnp.tanh(i_n + r * h_nn)
        return (1.0 - z) * n + z * h_in

    h0 = gru_layer(x, gru_hidden[0], params["w_ih0"], params["w_hh0"], params["b_ih0"], params["b_hh0"])
    h1 = gru_layer(h0, gru_hidden[1], params["w_ih1"], params["w_hh1"], params["b_ih1"], params["b_hh1"])
    q = h1 @ params["w_q"].T + params["b_q"]
    w_ref = params["w_ref"].reshape(H, H)
    e = jnp.einsum("bnh,dh->bnd", h_n, w_ref) + params["b_ref"]
    u = jnp.sum(params["v"] * jnp.tanh(q[:, None, :] + e), axis=-1)
    logits = 10.0 * jnp.tanh(u)
    logits = jnp.where(mask, -jnp.inf, logits)
    probs = jnp.maximum(jax.nn.softmax(logits, axis=1), 1e-8)
    return probs, jnp.stack([h0, h1], axis=0)


if __name__ == "__main__":
    B, N, H, L = 2, 8, 32, 2
    key = jax.random.PRNGKey(0)
    keys = jax.random.split(key, 20)

    h_n = jax.random.normal(keys[0], (B, N, H), jnp.float32)
    last_node = jax.random.randint(keys[1], (B, 1), 0, N)
    gru_hidden = jax.random.normal(keys[2], (L, B, H), jnp.float32)
    mask = jax.random.bernoulli(keys[3], 0.3, (B, N))
    mask = mask.at[:, 0].set(False)                     # at least one unmasked node per row

    scale = 1.0 / jnp.sqrt(jnp.float32(H))

    def uni(k, shape):
        return jax.random.uniform(k, shape, jnp.float32, -scale, scale)

    params = {
        # nn.GRU(hidden, hidden, num_layers=2): weight_ih/hh_l{0,1} (3H,H), biases (3H,)
        "w_ih0": uni(keys[4], (3 * H, H)), "w_hh0": uni(keys[5], (3 * H, H)),
        "b_ih0": uni(keys[6], (3 * H,)),   "b_hh0": uni(keys[7], (3 * H,)),
        "w_ih1": uni(keys[8], (3 * H, H)), "w_hh1": uni(keys[9], (3 * H, H)),
        "b_ih1": uni(keys[10], (3 * H,)),  "b_hh1": uni(keys[11], (3 * H,)),
        # AttentionDecoder: Linear(H,H), Conv1d(H,H,1), v (H,)
        "w_q": uni(keys[12], (H, H)),      "b_q": uni(keys[13], (H,)),
        "w_ref": uni(keys[14], (H, H, 1)), "b_ref": uni(keys[15], (H,)),
        "v": uni(keys[16], (H,)),
    }

    # --- one-time packing / once-per-sequence precompute (hoisted out of the step) ---
    packed = pack_decoder_params(params)                       # at init
    h_flat, e_proj = precompute_reference(packed, h_n)         # per decode sequence

    # --- step 1 ---
    probs, new_h = sequential_decoder_supervised_step(
        packed, h_flat, e_proj, last_node, gru_hidden, mask)
    # --- step 2: carry the (aliased) hidden state forward ---
    last_node2 = (last_node + 1) % N
    probs2, new_h2 = sequential_decoder_supervised_step(
        packed, h_flat, e_proj, last_node2, new_h, mask)
    jax.block_until_ready((probs, new_h, probs2, new_h2))

    ref_probs, ref_h = _reference(params, h_n, last_node, gru_hidden, mask)
    ref_probs2, ref_h2 = _reference(params, h_n, last_node2, ref_h, mask)

    assert jnp.allclose(new_h, ref_h, atol=1e-5, rtol=1e-5), "gru_hidden mismatch (step 1)"
    assert jnp.allclose(probs, ref_probs, atol=1e-4, rtol=1e-4), "probs mismatch (step 1)"
    assert jnp.allclose(new_h2, ref_h2, atol=1e-4, rtol=1e-4), "gru_hidden mismatch (step 2)"
    assert jnp.allclose(probs2, ref_probs2, atol=1e-4, rtol=1e-4), "probs mismatch (step 2)"
    print("KERNEL_OK")
</pallas_src>

<mosaic_0001>
module attributes {stable_mosaic.version = 11 : i64} {
  func.func @_decoder_step_kernel(%arg0: memref<2xi32, #tpu.memory_space<smem>>, %arg1: memref<16x32xf32, #tpu.memory_space<any>>, %arg2: memref<2x2x32xf32, #tpu.memory_space<vmem>>, %arg3: memref<2x8xf32, #tpu.memory_space<vmem>>, %arg4: memref<2x8x32xf32, #tpu.memory_space<vmem>>, %arg5: memref<2x64x128xf32, #tpu.memory_space<vmem>>, %arg6: memref<2x2x128xf32, #tpu.memory_space<vmem>>, %arg7: memref<32x32xf32, #tpu.memory_space<vmem>>, %arg8: memref<2x32xf32, #tpu.memory_space<vmem>>, %arg9: memref<2x8xf32, #tpu.memory_space<vmem>>, %arg10: memref<2x2x32xf32, #tpu.memory_space<vmem>>, %arg11: memref<2x32xf32, #tpu.memory_space<vmem>>, %arg12: memref<2x!tpu.dma_semaphore, #tpu.memory_space<semaphore_mem>>) attributes {dimension_semantics = [], scalar_prefetch = 0 : i64, scratch_operands = 2 : i64, tpu.core_type = #tpu.core_type<tc>} {
    %c0_i32 = arith.constant 0 : i32
    %c2_i32 = arith.constant 2 : i32
    %0 = arith.addi %c0_i32, %c2_i32 : i32
    %c1_i32 = arith.constant 1 : i32
    scf.for %arg13 = %c0_i32 to %0 step %c1_i32  : i32 {
      %c1_i32_69 = arith.constant 1 : i32
      %134 = arith.muli %arg13, %c1_i32_69 : i32
      %c0_i32_70 = arith.constant 0 : i32
      %135 = arith.addi %c0_i32_70, %134 : i32
      %136 = arith.index_cast %135 : i32 to index
      %137 = memref.load %arg0[%136] : memref<2xi32, #tpu.memory_space<smem>>
      %c8_i32 = arith.constant 8 : i32
      %138 = arith.muli %135, %c8_i32 : i32
      %139 = arith.addi %137, %138 : i32
      %c0_i32_71 = arith.constant 0 : i32
      %140 = tpu.memref_slice %arg1[%139, %c0_i32_71] : memref<16x32xf32, #tpu.memory_space<any>> -> memref<1x32xf32, #tpu.memory_space<any>>
      %141 = tpu.memref_squeeze %140 : memref<1x32xf32, #tpu.memory_space<any>> -> memref<32xf32, #tpu.memory_space<any>>
      %c0_i32_72 = arith.constant 0 : i32
      %142 = tpu.memref_slice %arg11[%135, %c0_i32_72] : memref<2x32xf32, #tpu.memory_space<vmem>> -> memref<1x32xf32, #tpu.memory_space<vmem>>
      %143 = tpu.memref_squeeze %142 : memref<1x32xf32, #tpu.memory_space<vmem>> -> memref<32xf32, #tpu.memory_space<vmem>>
      %144 = tpu.memref_slice %arg12[%135] : memref<2x!tpu.dma_semaphore, #tpu.memory_space<semaphore_mem>> -> memref<1x!tpu.dma_semaphore, #tpu.memory_space<semaphore_mem>>
      %145 = tpu.memref_squeeze %144 : memref<1x!tpu.dma_semaphore, #tpu.memory_space<semaphore_mem>> -> memref<!tpu.dma_semaphore, #tpu.memory_space<semaphore_mem>>
      tpu.enqueue_dma source(%141 : memref<32xf32, #tpu.memory_space<any>>) target(%143 : memref<32xf32, #tpu.memory_space<vmem>>) target_semaphore(%145 : memref<!tpu.dma_semaphore, #tpu.memory_space<semaphore_mem>>)
    }
    %c2_i32_0 = arith.constant 2 : i32
    %c0_i32_1 = arith.constant 0 : i32
    %c2_i32_2 = arith.constant 2 : i32
    %1 = arith.addi %c0_i32_1, %c2_i32_2 : i32
    %c1_i32_3 = arith.constant 1 : i32
    scf.for %arg13 = %c0_i32_1 to %1 step %c1_i32_3  : i32 {
      %c1_i32_69 = arith.constant 1 : i32
      %134 = arith.muli %arg13, %c1_i32_69 : i32
      %c0_i32_70 = arith.constant 0 : i32
      %135 = arith.addi %c0_i32_70, %134 : i32
      %136 = arith.index_cast %135 : i32 to index
      %137 = memref.load %arg0[%136] : memref<2xi32, #tpu.memory_space<smem>>
      %c8_i32 = arith.constant 8 : i32
      %138 = arith.muli %135, %c8_i32 : i32
      %139 = arith.addi %137, %138 : i32
      %c0_i32_71 = arith.constant 0 : i32
      %140 = tpu.memref_slice %arg1[%139, %c0_i32_71] : memref<16x32xf32, #tpu.memory_space<any>> -> memref<1x32xf32, #tpu.memory_space<any>>
      %141 = tpu.memref_squeeze %140 : memref<1x32xf32, #tpu.memory_space<any>> -> memref<32xf32, #tpu.memory_space<any>>
      %c0_i32_72 = arith.constant 0 : i32
      %142 = tpu.memref_slice %arg11[%135, %c0_i32_72] : memref<2x32xf32, #tpu.memory_space<vmem>> -> memref<1x32xf32, #tpu.memory_space<vmem>>
      %143 = tpu.memref_squeeze %142 : memref<1x32xf32, #tpu.memory_space<vmem>> -> memref<32xf32, #tpu.memory_space<vmem>>
      %144 = tpu.memref_slice %arg12[%135] : memref<2x!tpu.dma_semaphore, #tpu.memory_space<semaphore_mem>> -> memref<1x!tpu.dma_semaphore, #tpu.memory_space<semaphore_mem>>
      %145 = tpu.memref_squeeze %144 : memref<1x!tpu.dma_semaphore, #tpu.memory_space<semaphore_mem>> -> memref<!tpu.dma_semaphore, #tpu.memory_space<semaphore_mem>>
      tpu.wait_dma2 semaphore(%145 : memref<!tpu.dma_semaphore, #tpu.memory_space<semaphore_mem>>) src(%141 : memref<32xf32, #tpu.memory_space<any>>) dst(%143 : memref<32xf32, #tpu.memory_space<vmem>>)
    }
    %c2_i32_4 = arith.constant 2 : i32
    %c0 = arith.constant 0 : index
    %c0_5 = arith.constant 0 : index
    %2 = vector.load %arg11[%c0, %c0_5] : memref<2x32xf32, #tpu.memory_space<vmem>>, vector<2x32xf32>
    %c0_6 = arith.constant 0 : index
    %c0_7 = arith.constant 0 : index
    %c0_8 = arith.constant 0 : index
    %3 = vector.load %arg2[%c0_6, %c0_7, %c0_8] : memref<2x2x32xf32, #tpu.memory_space<vmem>>, vector<1x2x32xf32>
    %4 = vector.shape_cast %3 : vector<1x2x32xf32> to vector<2x32xf32>
    %c0_9 = arith.constant 0 : index
    %c0_10 = arith.constant 0 : index
    %c0_11 = arith.constant 0 : index
    %5 = vector.load %arg5[%c0_9, %c0_10, %c0_11] : memref<2x64x128xf32, #tpu.memory_space<vmem>>, vector<1x32x128xf32>
    %6 = vector.shape_cast %5 : vector<1x32x128xf32> to vector<32x128xf32>
    %cst = arith.constant dense<0.000000e+00> : vector<2x128xf32>
    %7 = tpu.matmul %2, %6, %cst {dimension_numbers = #tpu.dot_dimension_numbers<[1], [0], [0], [1], [0, 0, 1, 1], [], []>} : vector<2x32xf32>, vector<32x128xf32>, vector<2x128xf32> -> vector<2x128xf32>
    %c0_12 = arith.constant 0 : index
    %c0_13 = arith.constant 0 : index
    %c0_14 = arith.constant 0 : index
    %8 = vector.load %arg6[%c0_12, %c0_13, %c0_14] : memref<2x2x128xf32, #tpu.memory_space<vmem>>, vector<1x1x128xf32>
    %9 = vector.shape_cast %8 : vector<1x1x128xf32> to vector<128xf32>
    %10 = vector.shape_cast %9 : vector<128xf32> to vector<1x128xf32>
    %11 = vector.broadcast %10 : vector<1x128xf32> to vector<2x128xf32>
    %12 = arith.addf %7, %11 : vector<2x128xf32>
    %c0_15 = arith.constant 0 : index
    %c32 = arith.constant 32 : index
    %c0_16 = arith.constant 0 : index
    %13 = vector.load %arg5[%c0_15, %c32, %c0_16] : memref<2x64x128xf32, #tpu.memory_space<vmem>>, vector<1x32x128xf32>
    %14 = vector.shape_cast %13 : vector<1x32x128xf32> to vector<32x128xf32>
    %cst_17 = arith.constant dense<0.000000e+00> : vector<2x128xf32>
    %15 = tpu.matmul %4, %14, %cst_17 {dimension_numbers = #tpu.dot_dimension_numbers<[1], [0], [0], [1], [0, 0, 1, 1], [], []>} : vector<2x32xf32>, vector<32x128xf32>, vector<2x128xf32> -> vector<2x128xf32>
    %c0_18 = arith.constant 0 : index
    %c1 = arith.constant 1 : index
    %c0_19 = arith.constant 0 : index
    %16 = vector.load %arg6[%c0_18, %c1, %c0_19] : memref<2x2x128xf32, #tpu.memory_space<vmem>>, vector<1x1x128xf32>
    %17 = vector.shape_cast %16 : vector<1x1x128xf32> to vector<128xf32>
    %18 = vector.shape_cast %17 : vector<128xf32> to vector<1x128xf32>
    %19 = vector.broadcast %18 : vector<1x128xf32> to vector<2x128xf32>
    %20 = arith.addf %15, %19 : vector<2x128xf32>
    %21 = vector.extract_strided_slice %12 {offsets = [0, 0], sizes = [2, 32], strides = [1, 1]} : vector<2x128xf32> to vector<2x32xf32>
    %22 = vector.extract_strided_slice %20 {offsets = [0, 0], sizes = [2, 32], strides = [1, 1]} : vector<2x128xf32> to vector<2x32xf32>
    %23 = arith.addf %21, %22 : vector<2x32xf32>
    %24 = arith.negf %23 : vector<2x32xf32>
    %25 = math.exp %24 : vector<2x32xf32>
    %cst_20 = arith.constant 1.000000e+00 : f32
    %26 = vector.broadcast %cst_20 : f32 to vector<2x32xf32>
    %27 = arith.addf %26, %25 : vector<2x32xf32>
    %28 = arith.divf %26, %27 : vector<2x32xf32>
    %29 = vector.extract_strided_slice %12 {offsets = [0, 32], sizes = [2, 32], strides = [1, 1]} : vector<2x128xf32> to vector<2x32xf32>
    %30 = vector.extract_strided_slice %20 {offsets = [0, 32], sizes = [2, 32], strides = [1, 1]} : vector<2x128xf32> to vector<2x32xf32>
    %31 = arith.addf %29, %30 : vector<2x32xf32>
    %32 = arith.negf %31 : vector<2x32xf32>
    %33 = math.exp %32 : vector<2x32xf32>
    %cst_21 = arith.constant 1.000000e+00 : f32
    %34 = vector.broadcast %cst_21 : f32 to vector<2x32xf32>
    %35 = arith.addf %34, %33 : vector<2x32xf32>
    %36 = arith.divf %34, %35 : vector<2x32xf32>
    %37 = vector.extract_strided_slice %12 {offsets = [0, 64], sizes = [2, 32], strides = [1, 1]} : vector<2x128xf32> to vector<2x32xf32>
    %38 = vector.extract_strided_slice %20 {offsets = [0, 64], sizes = [2, 32], strides = [1, 1]} : vector<2x128xf32> to vector<2x32xf32>
    %39 = arith.mulf %28, %38 : vector<2x32xf32>
    %40 = arith.addf %37, %39 : vector<2x32xf32>
    %41 = math.tanh %40 : vector<2x32xf32>
    %cst_22 = arith.constant 1.000000e+00 : f32
    %42 = vector.broadcast %cst_22 : f32 to vector<2x32xf32>
    %43 = arith.subf %42, %36 : vector<2x32xf32>
    %44 = arith.mulf %43, %41 : vector<2x32xf32>
    %45 = arith.mulf %36, %4 : vector<2x32xf32>
    %46 = arith.addf %44, %45 : vector<2x32xf32>
    %c1_23 = arith.constant 1 : index
    %c0_24 = arith.constant 0 : index
    %c0_25 = arith.constant 0 : index
    %47 = vector.load %arg2[%c1_23, %c0_24, %c0_25] : memref<2x2x32xf32, #tpu.memory_space<vmem>>, vector<1x2x32xf32>
    %48 = vector.shape_cast %47 : vector<1x2x32xf32> to vector<2x32xf32>
    %c1_26 = arith.constant 1 : index
    %c0_27 = arith.constant 0 : index
    %c0_28 = arith.constant 0 : index
    %49 = vector.load %arg5[%c1_26, %c0_27, %c0_28] : memref<2x64x128xf32, #tpu.memory_space<vmem>>, vector<1x32x128xf32>
    %50 = vector.shape_cast %49 : vector<1x32x128xf32> to vector<32x128xf32>
    %cst_29 = arith.constant dense<0.000000e+00> : vector<2x128xf32>
    %51 = tpu.matmul %46, %50, %cst_29 {dimension_numbers = #tpu.dot_dimension_numbers<[1], [0], [0], [1], [0, 0, 1, 1], [], []>} : vector<2x32xf32>, vector<32x128xf32>, vector<2x128xf32> -> vector<2x128xf32>
    %c1_30 = arith.constant 1 : index
    %c0_31 = arith.constant 0 : index
    %c0_32 = arith.constant 0 : index
    %52 = vector.load %arg6[%c1_30, %c0_31, %c0_32] : memref<2x2x128xf32, #tpu.memory_space<vmem>>, vector<1x1x128xf32>
    %53 = vector.shape_cast %52 : vector<1x1x128xf32> to vector<128xf32>
    %54 = vector.shape_cast %53 : vector<128xf32> to vector<1x128xf32>
    %55 = vector.broadcast %54 : vector<1x128xf32> to vector<2x128xf32>
    %56 = arith.addf %51, %55 : vector<2x128xf32>
    %c1_33 = arith.constant 1 : index
    %c32_34 = arith.constant 32 : index
    %c0_35 = arith.constant 0 : index
    %57 = vector.load %arg5[%c1_33, %c32_34, %c0_35] : memref<2x64x128xf32, #tpu.memory_space<vmem>>, vector<1x32x128xf32>
    %58 = vector.shape_cast %57 : vector<1x32x128xf32> to vector<32x128xf32>
    %cst_36 = arith.constant dense<0.000000e+00> : vector<2x128xf32>
    %59 = tpu.matmul %48, %58, %cst_36 {dimension_numbers = #tpu.dot_dimension_numbers<[1], [0], [0], [1], [0, 0, 1, 1], [], []>} : vector<2x32xf32>, vector<32x128xf32>, vector<2x128xf32> -> vector<2x128xf32>
    %c1_37 = arith.constant 1 : index
    %c1_38 = arith.constant 1 : index
    %c0_39 = arith.constant 0 : index
    %60 = vector.load %arg6[%c1_37, %c1_38, %c0_39] : memref<2x2x128xf32, #tpu.memory_space<vmem>>, vector<1x1x128xf32>
    %61 = vector.shape_cast %60 : vector<1x1x128xf32> to vector<128xf32>
    %62 = vector.shape_cast %61 : vector<128xf32> to vector<1x128xf32>
    %63 = vector.broadcast %62 : vector<1x128xf32> to vector<2x128xf32>
    %64 = arith.addf %59, %63 : vector<2x128xf32>
    %65 = vector.extract_strided_slice %56 {offsets = [0, 0], sizes = [2, 32], strides = [1, 1]} : vector<2x128xf32> to vector<2x32xf32>
    %66 = vector.extract_strided_slice %64 {offsets = [0, 0], sizes = [2, 32], strides = [1, 1]} : vector<2x128xf32> to vector<2x32xf32>
    %67 = arith.addf %65, %66 : vector<2x32xf32>
    %68 = arith.negf %67 : vector<2x32xf32>
    %69 = math.exp %68 : vector<2x32xf32>
    %cst_40 = arith.constant 1.000000e+00 : f32
    %70 = vector.broadcast %cst_40 : f32 to vector<2x32xf32>
    %71 = arith.addf %70, %69 : vector<2x32xf32>
    %72 = arith.divf %70, %71 : vector<2x32xf32>
    %73 = vector.extract_strided_slice %56 {offsets = [0, 32], sizes = [2, 32], strides = [1, 1]} : vector<2x128xf32> to vector<2x32xf32>
    %74 = vector.extract_strided_slice %64 {offsets = [0, 32], sizes = [2, 32], strides = [1, 1]} : vector<2x128xf32> to vector<2x32xf32>
    %75 = arith.addf %73, %74 : vector<2x32xf32>
    %76 = arith.negf %75 : vector<2x32xf32>
    %77 = math.exp %76 : vector<2x32xf32>
    %cst_41 = arith.constant 1.000000e+00 : f32
    %78 = vector.broadcast %cst_41 : f32 to vector<2x32xf32>
    %79 = arith.addf %78, %77 : vector<2x32xf32>
    %80 = arith.divf %78, %79 : vector<2x32xf32>
    %81 = vector.extract_strided_slice %56 {offsets = [0, 64], sizes = [2, 32], strides = [1, 1]} : vector<2x128xf32> to vector<2x32xf32>
    %82 = vector.extract_strided_slice %64 {offsets = [0, 64], sizes = [2, 32], strides = [1, 1]} : vector<2x128xf32> to vector<2x32xf32>
    %83 = arith.mulf %72, %82 : vector<2x32xf32>
    %84 = arith.addf %81, %83 : vector<2x32xf32>
    %85 = math.tanh %84 : vector<2x32xf32>
    %cst_42 = arith.constant 1.000000e+00 : f32
    %86 = vector.broadcast %cst_42 : f32 to vector<2x32xf32>
    %87 = arith.subf %86, %80 : vector<2x32xf32>
    %88 = arith.mulf %87, %85 : vector<2x32xf32>
    %89 = arith.mulf %80, %48 : vector<2x32xf32>
    %90 = arith.addf %88, %89 : vector<2x32xf32>
    %c0_43 = arith.constant 0 : index
    %c0_44 = arith.constant 0 : index
    %c0_45 = arith.constant 0 : index
    %91 = vector.load %arg10[%c0_43, %c0_44, %c0_45] : memref<2x2x32xf32, #tpu.memory_space<vmem>>, vector<1x2x32xf32>
    %92 = vector.shape_cast %91 : vector<1x2x32xf32> to vector<2x32xf32>
    %93 = vector.shape_cast %46 : vector<2x32xf32> to vector<1x2x32xf32>
    tpu.vector_store %arg10[%c0_43, %c0_44, %c0_45], %93 {strides = array<i32>} : memref<2x2x32xf32, #tpu.memory_space<vmem>>, vector<1x2x32xf32>,
    %c1_46 = arith.constant 1 : index
    %c0_47 = arith.constant 0 : index
    %c0_48 = arith.constant 0 : index
    %94 = vector.load %arg10[%c1_46, %c0_47, %c0_48] : memref<2x2x32xf32, #tpu.memory_space<vmem>>, vector<1x2x32xf32>
    %95 = vector.shape_cast %94 : vector<1x2x32xf32> to vector<2x32xf32>
    %96 = vector.shape_cast %90 : vector<2x32xf32> to vector<1x2x32xf32>
    tpu.vector_store %arg10[%c1_46, %c0_47, %c0_48], %96 {strides = array<i32>} : memref<2x2x32xf32, #tpu.memory_space<vmem>>, vector<1x2x32xf32>,
    %c0_49 = arith.constant 0 : index
    %c0_50 = arith.constant 0 : index
    %97 = vector.load %arg7[%c0_49, %c0_50] : memref<32x32xf32, #tpu.memory_space<vmem>>, vector<32x32xf32>
    %cst_51 = arith.constant dense<0.000000e+00> : vector<2x32xf32>
    %98 = tpu.matmul %90, %97, %cst_51 {dimension_numbers = #tpu.dot_dimension_numbers<[1], [0], [0], [1], [0, 0, 1, 1], [], []>} : vector<2x32xf32>, vector<32x32xf32>, vector<2x32xf32> -> vector<2x32xf32>
    %c0_52 = arith.constant 0 : index
    %c0_53 = arith.constant 0 : index
    %99 = vector.load %arg8[%c0_52, %c0_53] : memref<2x32xf32, #tpu.memory_space<vmem>>, vector<1x32xf32>
    %100 = vector.shape_cast %99 : vector<1x32xf32> to vector<32xf32>
    %101 = vector.shape_cast %100 : vector<32xf32> to vector<1x32xf32>
    %102 = vector.broadcast %101 : vector<1x32xf32> to vector<2x32xf32>
    %103 = arith.addf %98, %102 : vector<2x32xf32>
    %c1_54 = arith.constant 1 : index
    %c0_55 = arith.constant 0 : index
    %104 = vector.load %arg8[%c1_54, %c0_55] : memref<2x32xf32, #tpu.memory_space<vmem>>, vector<1x32xf32>
    %105 = vector.shape_cast %103 : vector<2x32xf32> to vector<2x1x32xf32>
    %c0_56 = arith.constant 0 : index
    %c0_57 = arith.constant 0 : index
    %c0_58 = arith.constant 0 : index
    %106 = vector.load %arg4[%c0_56, %c0_57, %c0_58] : memref<2x8x32xf32, #tpu.memory_space<vmem>>, vector<2x8x32xf32>
    %107 = vector.broadcast %105 : vector<2x1x32xf32> to vector<2x8x32xf32>
    %108 = arith.addf %107, %106 : vector<2x8x32xf32>
    %109 = math.tanh %108 : vector<2x8x32xf32>
    %110 = vector.shape_cast %104 : vector<1x32xf32> to vector<1x1x32xf32>
    %111 = vector.broadcast %110 : vector<1x1x32xf32> to vector<2x8x32xf32>
    %112 = arith.mulf %111, %109 : vector<2x8x32xf32>
    %cst_59 = arith.constant dense<0.000000e+00> : vector<2x8xf32>
    %113 = vector.multi_reduction <add>, %112, %cst_59 [2] : vector<2x8x32xf32> to vector<2x8xf32>
    %114 = math.tanh %113 : vector<2x8xf32>
    %cst_60 = arith.constant 1.000000e+01 : f32
    %115 = vector.broadcast %cst_60 : f32 to vector<2x8xf32>
    %116 = arith.mulf %115, %114 : vector<2x8xf32>
    %c0_61 = arith.constant 0 : index
    %c0_62 = arith.constant 0 : index
    %117 = vector.load %arg3[%c0_61, %c0_62] : memref<2x8xf32, #tpu.memory_space<vmem>>, vector<2x8xf32>
    %cst_63 = arith.constant -1.000000e+30 : f32
    %118 = vector.broadcast %cst_63 : f32 to vector<2x8xf32>
    %119 = arith.mulf %117, %118 : vector<2x8xf32>
    %120 = arith.addf %116, %119 : vector<2x8xf32>
    %cst_64 = arith.constant dense<0xFF800000> : vector<2xf32>
    %121 = vector.multi_reduction <maximumf>, %120, %cst_64 [1] : vector<2x8xf32> to vector<2xf32>
    %122 = vector.shape_cast %121 : vector<2xf32> to vector<2x1xf32>
    %123 = vector.broadcast %122 : vector<2x1xf32> to vector<2x8xf32>
    %124 = arith.subf %120, %123 : vector<2x8xf32>
    %125 = math.exp %124 : vector<2x8xf32>
    %cst_65 = arith.constant dense<0.000000e+00> : vector<2xf32>
    %126 = vector.multi_reduction <add>, %125, %cst_65 [1] : vector<2x8xf32> to vector<2xf32>
    %127 = vector.shape_cast %126 : vector<2xf32> to vector<2x1xf32>
    %128 = tpu.reciprocal %127 : vector<2x1xf32> -> vector<2x1xf32>
    %129 = vector.broadcast %128 : vector<2x1xf32> to vector<2x8xf32>
    %130 = arith.mulf %125, %129 : vector<2x8xf32>
    %cst_66 = arith.constant 9.99999993E-9 : f32
    %131 = vector.broadcast %cst_66 : f32 to vector<2x8xf32>
    %132 = arith.maximumf %130, %131 : vector<2x8xf32>
    %c0_67 = arith.constant 0 : index
    %c0_68 = arith.constant 0 : index
    %133 = vector.load %arg9[%c0_67, %c0_68] : memref<2x8xf32, #tpu.memory_space<vmem>>, vector<2x8xf32>
    tpu.vector_store %arg9[%c0_67, %c0_68], %132 {strides = array<i32>} : memref<2x8xf32, #tpu.memory_space<vmem>>, vector<2x8xf32>,
    return
  }
}

</mosaic_0001>

<llo_original>
// kernel: sequential_decoder_supervised_step.1
$region0: #{sequential_decoder_supervised_step.1}
  #allocation0 [shape = 'u32[]', space=smem, size = 0x4, offset = 0x4, fixed_abs, tag = 'smem constant byte address 0x4 - core index']
  #allocation1 [shape = 'u32[144,128]{1,0:T(1,128)}', space=vmem, size = 0x12000, scoped, tag = 'internal scratch']
  #allocation2 [shape = 'f32[2,32]{1,0:T(2,128)}', space=vmem, size = 0x400, scoped, tag = 'scratch operand']
  #allocation3 [shape = 's32[2]{0}', space=sflag, size = 0x8, scoped, tag = 'scratch operand']
  #allocation15 [shape = 's32[]', space=sflag, size = 0x4, offset = 0, fixed_abs, tag = 'sflag constant byte address 0x0 - dummy sync flag']
  #allocation16 [shape = 's32[]', space=sflag, size = 0x4, offset = 0, fixed_abs, tag = 'sflag constant byte address 0x0 - dummy sync flag']
  #allocation17 [shape = 'u32[]', space=smem, size = 0x4, offset = 0x44, fixed_abs, tag = 'smem constant byte address 0x44 - assertion arg 0']
  #allocation18 [shape = 'u32[]', space=smem, size = 0x4, offset = 0x48, fixed_abs, tag = 'smem constant byte address 0x48 - assertion arg 1']
  %s0 = inlined_call_operand.hbm [shape: s32[2], index: 0, kind: input, shape index: {}]
  %s1 = inlined_call_operand.hbm [shape: f32[16,32], index: 1, kind: input, shape index: {}]
  %s2 = inlined_call_operand.hbm [shape: f32[2,2,32], index: 2, kind: input, shape index: {}, may-alias: {2,10}]
  %s3 = inlined_call_operand.vmem [shape: f32[2,8], index: 3, kind: input, shape index: {}]
  %s4 = inlined_call_operand.hbm [shape: f32[2,8,32], index: 4, kind: input, shape index: {}]
  %s5 = inlined_call_operand.hbm [shape: f32[2,64,128], index: 5, kind: input, shape index: {}]
  %s6 = inlined_call_operand.vmem [shape: f32[2,2,128], index: 6, kind: input, shape index: {}]
  %s7 = inlined_call_operand.vmem [shape: f32[32,32], index: 7, kind: input, shape index: {}]
  %s8 = inlined_call_operand.vmem [shape: f32[2,32], index: 8, kind: input, shape index: {}]
  %s9 = inlined_call_operand.hbm [shape: f32[2,8], index: 9, kind: output, shape index: {0}]
  %s10 = inlined_call_operand.hbm [shape: f32[2,2,32], index: 10, kind: output, shape index: {1}, may-alias: {2,10}]
  %11 = xla_tuple %s9, %s10
  %s12 = sld [smem:[#allocation0]]
  $region84: #{sequential_decoder_supervised_step.1} parent=0
    _
  %s14 = ssub.s32 1, %s12
  %s15 = scalar_select 0, %s14, %s12
  $region1: #{sequential_decoder_supervised_step.1} parent=0
    #allocation4 [shape = 'u8[512]{0}', space=smem, size = 0x200, scoped, tag = 'input window, operand 0, single buffered']
    #allocation5 [shape = 's32[1]{0}', space=sflag, size = 0x4, scoped, tag = 'scoped memory for sequential_decoder_supervised_step.1']
    #allocation6 [shape = 's32[1]{0}', space=sflag, size = 0x4, scoped, tag = 'scoped memory for sequential_decoder_supervised_step.1']
    #allocation7 [shape = 's32[1]{0}', space=sflag, size = 0x4, scoped, tag = 'scoped memory for sequential_decoder_supervised_step.1']
    #allocation8 [shape = 'u8[2048]{0}', space=vmem, size = 0x800, scoped, tag = 'input window, operand 2, single buffered']
    #allocation9 [shape = 'u8[8192]{0}', space=vmem, size = 0x2000, scoped, tag = 'input window, operand 4, single buffered']
    #allocation10 [shape = 's32[1]{0}', space=sflag, size = 0x4, scoped, tag = 'scoped memory for sequential_decoder_supervised_step.1']
    #allocation11 [shape = 'u8[65536]{0}', space=vmem, size = 0x10000, scoped, tag = 'input window, operand 5, single buffered']
    #allocation12 [shape = 'u8[1024]{0}', space=vmem, size = 0x400, scoped, tag = 'output window, operand 0, single buffered']
    #allocation13 [shape = 'u8[2048]{0}', space=vmem, size = 0x800, scoped, tag = 'output window, operand 1, single buffered']
    #allocation14 [shape = 's32[1]{0}', space=sflag, size = 0x4, scoped, tag = 'scoped memory for sequential_decoder_supervised_step.1']
    %16 = vsyncpa [#allocation7], 0
    %17 = vsyncpa [#allocation5], 0
    %18 = vsyncpa [#allocation10], 0
    %19 = vsyncpa [#allocation6], 0
    %20 = vsyncpa [#allocation14], 0
    // Predicated region
    $region2: #{sequential_decoder_supervised_step.1} parent=1 // pred_check
      _
    $region3: #{sequential_decoder_supervised_step.1} parent=1 // pred_check_branch
      %22 = sbr.rel (0) target = $region5
    $region4: #{sequential_decoder_supervised_step.1} parent=1 // pred_region
      %s24 = ssub.s32 16, 16
      %25 = vsyncadd [#allocation7], %s24
      %28 = dma.hbm_to_smem %s0, 16, [#allocation4], [#allocation7]
    $region5: #{sequential_decoder_supervised_step.1} parent=1 // pred_fallthru
      _
    // Predicated region
    $region6: #{sequential_decoder_supervised_step.1} parent=1 // pred_check
      _
    $region7: #{sequential_decoder_supervised_step.1} parent=1 // pred_check_branch
      %30 = sbr.rel (0) target = $region9
    $region8: #{sequential_decoder_supervised_step.1} parent=1 // pred_region
      %s32 = ssub.s32 64, 64
      %33 = vsyncadd [#allocation5], %s32
      %s34 = sshll.u32 [#allocation8], 4
      %s35 = int_to_ptr.vmem [resolvable:$true] %s34
      %40 = dma.hbm_to_vmem [thread:$0]  %s2, 64, %s35, [#allocation5], 32, 32, 2
    $region9: #{sequential_decoder_supervised_step.1} parent=1 // pred_fallthru
      _
    // Predicated region
    $region10: #{sequential_decoder_supervised_step.1} parent=1 // pred_check
      _
    $region11: #{sequential_decoder_supervised_step.1} parent=1 // pred_check_branch
      %42 = sbr.rel (0) target = $region13
    $region12: #{sequential_decoder_supervised_step.1} parent=1 // pred_region
      _
    $region13: #{sequential_decoder_supervised_step.1} parent=1 // pred_fallthru
      _
    // Predicated region
    $region14: #{sequential_decoder_supervised_step.1} parent=1 // pred_check
      _
    $region15: #{sequential_decoder_supervised_step.1} parent=1 // pred_check_branch
      %44 = sbr.rel (0) target = $region17
    $region16: #{sequential_decoder_supervised_step.1} parent=1 // pred_region
      %s46 = ssub.s32 256, 256
      %47 = vsyncadd [#allocation10], %s46
      %s48 = sshll.u32 [#allocation9], 4
      %s49 = int_to_ptr.vmem [resolvable:$true] %s48
      %54 = dma.hbm_to_vmem [thread:$0]  %s4, 256, %s49, [#allocation10], 128, 128, 8
    $region17: #{sequential_decoder_supervised_step.1} parent=1 // pred_fallthru
      _
    // Predicated region
    $region18: #{sequential_decoder_supervised_step.1} parent=1 // pred_check
      _
    $region19: #{sequential_decoder_supervised_step.1} parent=1 // pred_check_branch
      %56 = sbr.rel (0) target = $region21
    $region20: #{sequential_decoder_supervised_step.1} parent=1 // pred_region
      %s58 = ssub.s32 2048, 2048
      %59 = vsyncadd [#allocation10], %s58
      %s60 = sshll.u32 [#allocation11], 4
      %s61 = int_to_ptr.vmem [resolvable:$true] %s60
      %66 = dma.hbm_to_vmem [thread:$0]  %s5, 2048, %s61, [#allocation10], 128, 128, 8
    $region21: #{sequential_decoder_supervised_step.1} parent=1 // pred_fallthru
      _
    // Predicated region
    $region22: #{sequential_decoder_supervised_step.1} parent=1 // pred_check
      _
    $region23: #{sequential_decoder_supervised_step.1} parent=1 // pred_check_branch
      %68 = sbr.rel (0) target = $region25
    $region24: #{sequential_decoder_supervised_step.1} parent=1 // pred_region
      _
    $region25: #{sequential_decoder_supervised_step.1} parent=1 // pred_fallthru
      _
    // Predicated region
    $region26: #{sequential_decoder_supervised_step.1} parent=1 // pred_check
      _
    $region27: #{sequential_decoder_supervised_step.1} parent=1 // pred_check_branch
      %70 = sbr.rel (0) target = $region29
    $region28: #{sequential_decoder_supervised_step.1} parent=1 // pred_region
      _
    $region29: #{sequential_decoder_supervised_step.1} parent=1 // pred_fallthru
      _
    // Predicated region
    $region30: #{sequential_decoder_supervised_step.1} parent=1 // pred_check
      _
    $region31: #{sequential_decoder_supervised_step.1} parent=1 // pred_check_branch
      %72 = sbr.rel (0) target = $region33
    $region32: #{sequential_decoder_supervised_step.1} parent=1 // pred_region
      _
    $region33: #{sequential_decoder_supervised_step.1} parent=1 // pred_fallthru
      _
    // Predicated region
    $region34: #{sequential_decoder_supervised_step.1} parent=1 // pred_check
      _
    $region35: #{sequential_decoder_supervised_step.1} parent=1 // pred_check_branch
      %74 = sbr.rel (0) target = $region37
    $region36: #{sequential_decoder_supervised_step.1} parent=1 // pred_region
      %75 = dma.done [#allocation7], 16
    $region37: #{sequential_decoder_supervised_step.1} parent=1 // pred_fallthru
      _
    // Predicated region
    $region38: #{sequential_decoder_supervised_step.1} parent=1 // pred_check
      _
    $region39: #{sequential_decoder_supervised_step.1} parent=1 // pred_check_branch
      %77 = sbr.rel (0) target = $region41
    $region40: #{sequential_decoder_supervised_step.1} parent=1 // pred_region
      %78 = dma.done [#allocation5], 64
    $region41: #{sequential_decoder_supervised_step.1} parent=1 // pred_fallthru
      _
    // Predicated region
    $region42: #{sequential_decoder_supervised_step.1} parent=1 // pred_check
      _
    $region43: #{sequential_decoder_supervised_step.1} parent=1 // pred_check_branch
      %80 = sbr.rel (0) target = $region45
    $region44: #{sequential_decoder_supervised_step.1} parent=1 // pred_region
      %81 = dma.done [#allocation10], 256
    $region45: #{sequential_decoder_supervised_step.1} parent=1 // pred_fallthru
      _
    // Predicated region
    $region46: #{sequential_decoder_supervised_step.1} parent=1 // pred_check
      _
    $region47: #{sequential_decoder_supervised_step.1} parent=1 // pred_check_branch
      %83 = sbr.rel (0) target = $region49
    $region48: #{sequential_decoder_supervised_step.1} parent=1 // pred_region
      %84 = dma.done [#allocation10], 2048
    $region49: #{sequential_decoder_supervised_step.1} parent=1 // pred_fallthru
      _
    %85 = sfence
    loop: start=0, step=1, limit=2
    $region50: #{sequential_decoder_supervised_step.1} parent=1 // loop_pre_header
      _
    $region51: #{sequential_decoder_supervised_step.1} parent=1 // loop_header
      %s87 = sphi 0, %s91
      %p88 = scmp.ge.s32.totalorder %s87, 2
    $region52: #{sequential_decoder_supervised_step.1} parent=1 // loop_header_branch
      %90 = sbr.rel (%p88) target = $region56
    $region53: #{sequential_decoder_supervised_step.1} parent=1 // loop_body
      %s92 = sld [smem:[#allocation4 + %s87]]
      %s93 = smul.u32 %s87, 8
      %s94 = sadd.s32 %s92, %s93
      %s95 = smul.addr %s94, 16
      %s96 = scalar_lea.hbm %s1, %s95
      %s97 = scalar_lea.vmem [#allocation2], %s87
      %s98 = scalar_lea.sflag [#allocation3], %s87
      // Predicated region
      $region57: #{sequential_decoder_supervised_step.1} parent=53 // pred_check
        _
      $region58: #{sequential_decoder_supervised_step.1} parent=53 // pred_check_branch
        %100 = sbr.rel target = $region60
      $region59: #{sequential_decoder_supervised_step.1} parent=53 // pred_region
        %101 = sst [smem:[#allocation17]] [#allocation16]
        %102 = sst [smem:[#allocation18]] [#allocation15]
      $region60: #{sequential_decoder_supervised_step.1} parent=53 // pred_fallthru
        _
      %104 = shalt.err (0)
      %s106 = sshll.u32 %s97, 4
      %s107 = int_to_ptr.vmem [resolvable:$true] %s106
      %109 = dma.hbm_to_vmem [thread:$0]  %s96, 16, %s107, %s98
    $region54: #{sequential_decoder_supervised_step.1} parent=1 // loop_footer
      %s91 = sadd.s32 1, %s87
    $region55: #{sequential_decoder_supervised_step.1} parent=1 // loop_footer_branch
      %86 = sbr.rel target = $region51
    $region56: #{sequential_decoder_supervised_step.1} parent=1 // loop_exit
      _
    loop: start=0, step=1, limit=2
    $region61: #{sequential_decoder_supervised_step.1} parent=1 // loop_pre_header
      _
    $region62: #{sequential_decoder_supervised_step.1} parent=1 // loop_header
      %s111 = sphi 0, %s115
      %p112 = scmp.ge.s32.totalorder %s111, 2
    $region63: #{sequential_decoder_supervised_step.1} parent=1 // loop_header_branch
      %114 = sbr.rel (%p112) target = $region67
    $region64: #{sequential_decoder_supervised_step.1} parent=1 // loop_body
      %s116 = sld [smem:[#allocation4 + %s111]]
      %s117 = scalar_lea.sflag [#allocation3], %s111
      %119 = dma.done %s117, 16
    $region65: #{sequential_decoder_supervised_step.1} parent=1 // loop_footer
      %s115 = sadd.s32 1, %s111
    $region66: #{sequential_decoder_supervised_step.1} parent=1 // loop_footer_branch
      %110 = sbr.rel target = $region62
    $region67: #{sequential_decoder_supervised_step.1} parent=1 // loop_exit
      _
    %v120 = vld [vmem:[#allocation2] sm:$0x3]
    %v121 = vld [vmem:[#allocation8] sm:$0x3]
    %v122 = vld [vmem:[#allocation11] sm:$0xff]
    %v123 = vld [vmem:[#allocation11 + $0x8] sm:$0xff]
    %v124 = vld [vmem:[#allocation11 + $0x10] sm:$0xff]
    %v125 = vld [vmem:[#allocation11 + $0x18] sm:$0xff]
    %v126 = vld [vmem:[%s6] sm:$0x1]
    %v127 = vlaneseq
    %v128 = vshrl.u32 %v127, 7
    %v129 = vsub.s32 0, %v128
    %v130 = vrot.slane %v126, %v129
    %vm131 = vcmask 261120
    %v133 = vsel %vm131, %v120, 0
    %135 = vmatprep.subr.mxu0 0.0
    %136 = vmatpush1.msra.mxu0 %v122
    %137 = vmatprep.subr.mxu0 0.0
    %138 = vmatpush1.msra.mxu0 %v123
    %139 = vmatprep.subr.mxu0 0.0
    %140 = vmatpush1.msra.mxu0 %v124
    %141 = vmatprep.subr.mxu0 0.0
    %142 = vmatpush1.msra.mxu0 %v125
    %143 = vmatprep.subr.mxu0 0.0
    %144 = vmatpush1.msra.mxu0 0.0
    %145 = vmatprep.subr.mxu0 0.0
    %146 = vmatpush1.msra.mxu0 0.0
    %147 = vmatprep.subr.mxu0 0.0
    %148 = vmatpush1.msra.mxu0 0.0
    %149 = vmatprep.subr.mxu0 0.0
    %150 = vmatpush1.msra.mxu0 0.0
    %151 = vmatprep.subr.mxu0 0.0
    %152 = vmatpush1.msra.mxu0 0.0
    %153 = vmatprep.subr.mxu0 0.0
    %154 = vmatpush1.msra.mxu0 0.0
    %155 = vmatprep.subr.mxu0 0.0
    %156 = vmatpush1.msra.mxu0 0.0
    %157 = vmatprep.subr.mxu0 0.0
    %158 = vmatpush1.msra.mxu0 0.0
    %159 = vmatprep.subr.mxu0 0.0
    %160 = vmatpush1.msra.mxu0 0.0
    %161 = vmatprep.subr.mxu0 0.0
    %162 = vmatpush1.msra.mxu0 0.0
    %163 = vmatprep.subr.mxu0 0.0
    %164 = vmatpush1.msra.mxu0 0.0
    %165 = vmatprep.subr.mxu0 0.0
    %166 = vmatpush1.msra.mxu0 0.0
    %167 = vmatprep.subr.mxu0 0.0
    %168 = vmatpush1.msra.mxu0 0.0
    %169 = vmatprep.subr.mxu0 0.0
    %170 = vmatpush1.msra.mxu0 0.0
    %171 = vmatprep.subr.mxu0 0.0
    %172 = vmatpush1.msra.mxu0 0.0
    %173 = vmatprep.subr.mxu0 0.0
    %174 = vmatpush1.msra.mxu0 0.0
    %175 = vmatprep.subr.mxu0 0.0
    %176 = vmatpush1.msra.mxu0 0.0
    %177 = vmatprep.subr.mxu0 0.0
    %178 = vmatpush1.msra.mxu0 0.0
    %179 = vmatprep.subr.mxu0 0.0
    %180 = vmatpush1.msra.mxu0 0.0
    %181 = vmatprep.subr.mxu0 0.0
    %182 = vmatpush1.msra.mxu0 0.0
    %183 = vmatprep.subr.mxu0 0.0
    %184 = vmatpush1.msra.mxu0 0.0
    %185 = vmatprep.subr.mxu0 0.0
    %186 = vmatpush1.msra.mxu0 0.0
    %187 = vmatprep.subr.mxu0 0.0
    %188 = vmatpush1.msra.mxu0 0.0
    %189 = vmatprep.subr.mxu0 0.0
    %190 = vmatpush1.msra.mxu0 0.0
    %191 = vmatprep.subr.mxu0 0.0
    %192 = vmatpush1.msra.mxu0 0.0
    %193 = vmatprep.subr.mxu0 0.0
    %194 = vmatpush1.msra.mxu0 0.0
    %195 = vmatprep.subr.mxu0 0.0
    %196 = vmatpush1.msra.mxu0 0.0
    %197 = vmatprep.subr.mxu0 0.0
    %198 = vmatpush1.msra.mxu0 0.0
    %199 = vmatprep.mubr.f32.mxu0 0.0
    %200 = vmatmul.mubr.f32.gmra.mrb[0].mxu0 %v133
    %v201 = vpop.f32.mrb[0].mxu0
    %v202 = vadd.f32 %v130, %v201
    %v203 = vpop.f32.mrb[0].mxu0
    %204 = vdwg.mxu0
    %v205 = vld [vmem:[#allocation11 + $0x20] sm:$0xff]
    %v206 = vld [vmem:[#allocation11 + $0x28] sm:$0xff]
    %v207 = vld [vmem:[#allocation11 + $0x30] sm:$0xff]
    %v208 = vld [vmem:[#allocation11 + $0x38] sm:$0xff]
    %v209 = vld [vmem:[%s6 + $0x1] sm:$0x1]
    %v210 = vlaneseq
    %v211 = vshrl.u32 %v210, 7
    %v212 = vsub.s32 0, %v211
    %v213 = vrot.slane %v209, %v212
    %v215 = vsel %vm131, %v121, 0
    %217 = vmatprep.subr.mxu0 0.0
    %218 = vmatpush1.msra.mxu0 %v205
    %219 = vmatprep.subr.mxu0 0.0
    %220 = vmatpush1.msra.mxu0 %v206
    %221 = vmatprep.subr.mxu0 0.0
    %222 = vmatpush1.msra.mxu0 %v207
    %223 = vmatprep.subr.mxu0 0.0
    %224 = vmatpush1.msra.mxu0 %v208
    %225 = vmatprep.subr.mxu0 0.0
    %226 = vmatpush1.msra.mxu0 0.0
    %227 = vmatprep.subr.mxu0 0.0
    %228 = vmatpush1.msra.mxu0 0.0
    %229 = vmatprep.subr.mxu0 0.0
    %230 = vmatpush1.msra.mxu0 0.0
    %231 = vmatprep.subr.mxu0 0.0
    %232 = vmatpush1.msra.mxu0 0.0
    %233 = vmatprep.subr.mxu0 0.0
    %234 = vmatpush1.msra.mxu0 0.0
    %235 = vmatprep.subr.mxu0 0.0
    %236 = vmatpush1.msra.mxu0 0.0
    %237 = vmatprep.subr.mxu0 0.0
    %238 = vmatpush1.msra.mxu0 0.0
    %239 = vmatprep.subr.mxu0 0.0
    %240 = vmatpush1.msra.mxu0 0.0
    %241 = vmatprep.subr.mxu0 0.0
    %242 = vmatpush1.msra.mxu0 0.0
    %243 = vmatprep.subr.mxu0 0.0
    %244 = vmatpush1.msra.mxu0 0.0
    %245 = vmatprep.subr.mxu0 0.0
    %246 = vmatpush1.msra.mxu0 0.0
    %247 = vmatprep.subr.mxu0 0.0
    %248 = vmatpush1.msra.mxu0 0.0
    %249 = vmatprep.subr.mxu0 0.0
    %250 = vmatpush1.msra.mxu0 0.0
    %251 = vmatprep.subr.mxu0 0.0
    %252 = vmatpush1.msra.mxu0 0.0
    %253 = vmatprep.subr.mxu0 0.0
    %254 = vmatpush1.msra.mxu0 0.0
    %255 = vmatprep.subr.mxu0 0.0
    %256 = vmatpush1.msra.mxu0 0.0
    %257 = vmatprep.subr.mxu0 0.0
    %258 = vmatpush1.msra.mxu0 0.0
    %259 = vmatprep.subr.mxu0 0.0
    %260 = vmatpush1.msra.mxu0 0.0
    %261 = vmatprep.subr.mxu0 0.0
    %262 = vmatpush1.msra.mxu0 0.0
    %263 = vmatprep.subr.mxu0 0.0
    %264 = vmatpush1.msra.mxu0 0.0
    %265 = vmatprep.subr.mxu0 0.0
    %266 = vmatpush1.msra.mxu0 0.0
    %267 = vmatprep.subr.mxu0 0.0
    %268 = vmatpush1.msra.mxu0 0.0
    %269 = vmatprep.subr.mxu0 0.0
    %270 = vmatpush1.msra.mxu0 0.0
    %271 = vmatprep.subr.mxu0 0.0
    %272 = vmatpush1.msra.mxu0 0.0
    %273 = vmatprep.subr.mxu0 0.0
    %274 = vmatpush1.msra.mxu0 0.0
    %275 = vmatprep.subr.mxu0 0.0
    %276 = vmatpush1.msra.mxu0 0.0
    %277 = vmatprep.subr.mxu0 0.0
    %278 = vmatpush1.msra.mxu0 0.0
    %279 = vmatprep.subr.mxu0 0.0
    %280 = vmatpush1.msra.mxu0 0.0
    %281 = vmatprep.mubr.f32.mxu0 0.0
    %282 = vmatmul.mubr.f32.gmra.mrb[0].mxu0 %v215
    %v283 = vpop.f32.mrb[0].mxu0
    %v284 = vadd.f32 %v213, %v283
    %v285 = vpop.f32.mrb[0].mxu0
    %286 = vdwg.mxu0
    %v287 = vadd.f32 %v202, %v284
    %v288 = vxor.u32 %v287, 2147483648
    %v289 = vmul.f32 %v288, 1.442695
    %v290 = vpow.pop %v289
    %v291 = vadd.f32 %v290, 1.0
    %v292 = vrcp.pop %v291
    %v293 = vmul.f32 1.0, %v292
    %295 = vrot.lane.b32.xlu0 %v284, 64
    %v296 = vpop.permute.xlu0 %295
    %v298 = vmul.f32 %v293, %v296
    %300 = vrot.lane.b32.xlu0 %v298, 64
    %v301 = vpop.permute.xlu0 %300
    %v303 = vadd.f32 %v202, %v301
    %v304 = vtanh.pop %v303
    %v305 = vsub.f32 1.0, %v293
    %307 = vrot.lane.b32.xlu0 %v304, 96
    %v308 = vpop.permute.xlu0 %307
    %v310 = vmul.f32 %v305, %v308
    %311 = vrot.lane.b32.xlu0 %v121, 32
    %v312 = vpop.permute.xlu0 %311
    %v314 = vmul.f32 %v293, %v312
    %v315 = vadd.f32 %v310, %v314
    %s316 = scalar_lea.vmem [#allocation8], 2
    %v317 = vld [vmem:[%s316] sm:$0x3]
    %s318 = scalar_lea.vmem [#allocation11], 64
    %v319 = vld [vmem:[%s318] sm:$0xff]
    %v320 = vld [vmem:[%s318 + $0x8] sm:$0xff]
    %v321 = vld [vmem:[%s318 + $0x10] sm:$0xff]
    %v322 = vld [vmem:[%s318 + $0x18] sm:$0xff]
    %s323 = scalar_lea.vmem %s6, 2
    %v324 = vld [vmem:[%s323] sm:$0x1]
    %v325 = vlaneseq
    %v326 = vshrl.u32 %v325, 7
    %v327 = vsub.s32 0, %v326
    %v328 = vrot.slane %v324, %v327
    %330 = vrot.lane.b32.xlu0 %v315, 96
    %v331 = vpop.permute.xlu0 %330
    %v332 = vsel %vm131, %v331, 0
    %334 = vmatprep.subr.mxu0 0.0
    %335 = vmatpush1.msra.mxu0 %v319
    %336 = vmatprep.subr.mxu0 0.0
    %337 = vmatpush1.msra.mxu0 %v320
    %338 = vmatprep.subr.mxu0 0.0
    %339 = vmatpush1.msra.mxu0 %v321
    %340 = vmatprep.subr.mxu0 0.0
    %341 = vmatpush1.msra.mxu0 %v322
    %342 = vmatprep.subr.mxu0 0.0
    %343 = vmatpush1.msra.mxu0 0.0
    %344 = vmatprep.subr.mxu0 0.0
    %345 = vmatpush1.msra.mxu0 0.0
    %346 = vmatprep.subr.mxu0 0.0
    %347 = vmatpush1.msra.mxu0 0.0
    %348 = vmatprep.subr.mxu0 0.0
    %349 = vmatpush1.msra.mxu0 0.0
    %350 = vmatprep.subr.mxu0 0.0
    %351 = vmatpush1.msra.mxu0 0.0
    %352 = vmatprep.subr.mxu0 0.0
    %353 = vmatpush1.msra.mxu0 0.0
    %354 = vmatprep.subr.mxu0 0.0
    %355 = vmatpush1.msra.mxu0 0.0
    %356 = vmatprep.subr.mxu0 0.0
    %357 = vmatpush1.msra.mxu0 0.0
    %358 = vmatprep.subr.mxu0 0.0
    %359 = vmatpush1.msra.mxu0 0.0
    %360 = vmatprep.subr.mxu0 0.0
    %361 = vmatpush1.msra.mxu0 0.0
    %362 = vmatprep.subr.mxu0 0.0
    %363 = vmatpush1.msra.mxu0 0.0
    %364 = vmatprep.subr.mxu0 0.0
    %365 = vmatpush1.msra.mxu0 0.0
    %366 = vmatprep.subr.mxu0 0.0
    %367 = vmatpush1.msra.mxu0 0.0
    %368 = vmatprep.subr.mxu0 0.0
    %369 = vmatpush1.msra.mxu0 0.0
    %370 = vmatprep.subr.mxu0 0.0
    %371 = vmatpush1.msra.mxu0 0.0
    %372 = vmatprep.subr.mxu0 0.0
    %373 = vmatpush1.msra.mxu0 0.0
    %374 = vmatprep.subr.mxu0 0.0
    %375 = vmatpush1.msra.mxu0 0.0
    %376 = vmatprep.subr.mxu0 0.0
    %377 = vmatpush1.msra.mxu0 0.0
    %378 = vmatprep.subr.mxu0 0.0
    %379 = vmatpush1.msra.mxu0 0.0
    %380 = vmatprep.subr.mxu0 0.0
    %381 = vmatpush1.msra.mxu0 0.0
    %382 = vmatprep.subr.mxu0 0.0
    %383 = vmatpush1.msra.mxu0 0.0
    %384 = vmatprep.subr.mxu0 0.0
    %385 = vmatpush1.msra.mxu0 0.0
    %386 = vmatprep.subr.mxu0 0.0
    %387 = vmatpush1.msra.mxu0 0.0
    %388 = vmatprep.subr.mxu0 0.0
    %389 = vmatpush1.msra.mxu0 0.0
    %390 = vmatprep.subr.mxu0 0.0
    %391 = vmatpush1.msra.mxu0 0.0
    %392 = vmatprep.subr.mxu0 0.0
    %393 = vmatpush1.msra.mxu0 0.0
    %394 = vmatprep.subr.mxu0 0.0
    %395 = vmatpush1.msra.mxu0 0.0
    %396 = vmatprep.subr.mxu0 0.0
    %397 = vmatpush1.msra.mxu0 0.0
    %398 = vmatprep.mubr.f32.mxu0 0.0
    %399 = vmatmul.mubr.f32.gmra.mrb[0].mxu0 %v332
    %v400 = vpop.f32.mrb[0].mxu0
    %v401 = vadd.f32 %v328, %v400
    %v402 = vpop.f32.mrb[0].mxu0
    %403 = vdwg.mxu0
    %v404 = vld [vmem:[%s318 + $0x20] sm:$0xff]
    %v405 = vld [vmem:[%s318 + $0x28] sm:$0xff]
    %v406 = vld [vmem:[%s318 + $0x30] sm:$0xff]
    %v407 = vld [vmem:[%s318 + $0x38] sm:$0xff]
    %v408 = vld [vmem:[%s323 + $0x1] sm:$0x1]
    %v409 = vlaneseq
    %v410 = vshrl.u32 %v409, 7
    %v411 = vsub.s32 0, %v410
    %v412 = vrot.slane %v408, %v411
    %v414 = vsel %vm131, %v317, 0
    %416 = vmatprep.subr.mxu0 0.0
    %417 = vmatpush1.msra.mxu0 %v404
    %418 = vmatprep.subr.mxu0 0.0
    %419 = vmatpush1.msra.mxu0 %v405
    %420 = vmatprep.subr.mxu0 0.0
    %421 = vmatpush1.msra.mxu0 %v406
    %422 = vmatprep.subr.mxu0 0.0
    %423 = vmatpush1.msra.mxu0 %v407
    %424 = vmatprep.subr.mxu0 0.0
    %425 = vmatpush1.msra.mxu0 0.0
    %426 = vmatprep.subr.mxu0 0.0
    %427 = vmatpush1.msra.mxu0 0.0
    %428 = vmatprep.subr.mxu0 0.0
    %429 = vmatpush1.msra.mxu0 0.0
    %430 = vmatprep.subr.mxu0 0.0
    %431 = vmatpush1.msra.mxu0 0.0
    %432 = vmatprep.subr.mxu0 0.0
    %433 = vmatpush1.msra.mxu0 0.0
    %434 = vmatprep.subr.mxu0 0.0
    %435 = vmatpush1.msra.mxu0 0.0
    %436 = vmatprep.subr.mxu0 0.0
    %437 = vmatpush1.msra.mxu0 0.0
    %438 = vmatprep.subr.mxu0 0.0
    %439 = vmatpush1.msra.mxu0 0.0
    %440 = vmatprep.subr.mxu0 0.0
    %441 = vmatpush1.msra.mxu0 0.0
    %442 = vmatprep.subr.mxu0 0.0
    %443 = vmatpush1.msra.mxu0 0.0
    %444 = vmatprep.subr.mxu0 0.0
    %445 = vmatpush1.msra.mxu0 0.0
    %446 = vmatprep.subr.mxu0 0.0
    %447 = vmatpush1.msra.mxu0 0.0
    %448 = vmatprep.subr.mxu0 0.0
    %449 = vmatpush1.msra.mxu0 0.0
    %450 = vmatprep.subr.mxu0 0.0
    %451 = vmatpush1.msra.mxu0 0.0
    %452 = vmatprep.subr.mxu0 0.0
    %453 = vmatpush1.msra.mxu0 0.0
    %454 = vmatprep.subr.mxu0 0.0
    %455 = vmatpush1.msra.mxu0 0.0
    %456 = vmatprep.subr.mxu0 0.0
    %457 = vmatpush1.msra.mxu0 0.0
    %458 = vmatprep.subr.mxu0 0.0
    %459 = vmatpush1.msra.mxu0 0.0
    %460 = vmatprep.subr.mxu0 0.0
    %461 = vmatpush1.msra.mxu0 0.0
    %462 = vmatprep.subr.mxu0 0.0
    %463 = vmatpush1.msra.mxu0 0.0
    %464 = vmatprep.subr.mxu0 0.0
    %465 = vmatpush1.msra.mxu0 0.0
    %466 = vmatprep.subr.mxu0 0.0
    %467 = vmatpush1.msra.mxu0 0.0
    %468 = vmatprep.subr.mxu0 0.0
    %469 = vmatpush1.msra.mxu0 0.0
    %470 = vmatprep.subr.mxu0 0.0
    %471 = vmatpush1.msra.mxu0 0.0
    %472 = vmatprep.subr.mxu0 0.0
    %473 = vmatpush1.msra.mxu0 0.0
    %474 = vmatprep.subr.mxu0 0.0
    %475 = vmatpush1.msra.mxu0 0.0
    %476 = vmatprep.subr.mxu0 0.0
    %477 = vmatpush1.msra.mxu0 0.0
    %478 = vmatprep.subr.mxu0 0.0
    %479 = vmatpush1.msra.mxu0 0.0
    %480 = vmatprep.mubr.f32.mxu0 0.0
    %481 = vmatmul.mubr.f32.gmra.mrb[0].mxu0 %v414
    %v482 = vpop.f32.mrb[0].mxu0
    %v483 = vadd.f32 %v412, %v482
    %v484 = vpop.f32.mrb[0].mxu0
    %485 = vdwg.mxu0
    %v486 = vadd.f32 %v401, %v483
    %v487 = vxor.u32 %v486, 2147483648
    %v488 = vmul.f32 %v487, 1.442695
    %v489 = vpow.pop %v488
    %v490 = vadd.f32 %v489, 1.0
    %v491 = vrcp.pop %v490
    %v492 = vmul.f32 1.0, %v491
    %494 = vrot.lane.b32.xlu0 %v483, 64
    %v495 = vpop.permute.xlu0 %494
    %v497 = vmul.f32 %v492, %v495
    %499 = vrot.lane.b32.xlu0 %v497, 64
    %v500 = vpop.permute.xlu0 %499
    %v502 = vadd.f32 %v401, %v500
    %v503 = vtanh.pop %v502
    %v504 = vsub.f32 1.0, %v492
    %506 = vrot.lane.b32.xlu0 %v503, 96
    %v507 = vpop.permute.xlu0 %506
    %v509 = vmul.f32 %v504, %v507
    %510 = vrot.lane.b32.xlu0 %v317, 32
    %v511 = vpop.permute.xlu0 %510
    %v513 = vmul.f32 %v492, %v511
    %v514 = vadd.f32 %v509, %v513
    %vm516 = vcmask 254976
    %517 = vst.msk [vmem:[#allocation13] sm:$0x3] %vm516, %v331
    %519 = vrot.lane.b32.xlu0 %v514, 96
    %v520 = vpop.permute.xlu0 %519
    %s522 = scalar_lea.vmem [#allocation13], 2
    %523 = vst.msk [vmem:[%s522] sm:$0x3] %vm516, %v520
    %v524 = vld [vmem:[%s7] sm:$0xff]
    %v525 = vld [vmem:[%s7 + $0x8] sm:$0xff]
    %v526 = vld [vmem:[%s7 + $0x10] sm:$0xff]
    %v527 = vld [vmem:[%s7 + $0x18] sm:$0xff]
    %v528 = vld [vmem:[%s8] sm:$0x1]
    %v529 = vlaneseq
    %v530 = vshrl.u32 %v529, 7
    %v531 = vsub.s32 0, %v530
    %v532 = vrot.slane %v528, %v531
    %v533 = vsel %vm131, %v520, 0
    %535 = vmatprep.subr.mxu0 0.0
    %536 = vmatpush1.msra.mxu0 %v524
    %537 = vmatprep.subr.mxu0 0.0
    %538 = vmatpush1.msra.mxu0 %v525
    %539 = vmatprep.subr.mxu0 0.0
    %540 = vmatpush1.msra.mxu0 %v526
    %541 = vmatprep.subr.mxu0 0.0
    %542 = vmatpush1.msra.mxu0 %v527
    %543 = vmatprep.subr.mxu0 0.0
    %544 = vmatpush1.msra.mxu0 0.0
    %545 = vmatprep.subr.mxu0 0.0
    %546 = vmatpush1.msra.mxu0 0.0
    %547 = vmatprep.subr.mxu0 0.0
    %548 = vmatpush1.msra.mxu0 0.0
    %549 = vmatprep.subr.mxu0 0.0
    %550 = vmatpush1.msra.mxu0 0.0
    %551 = vmatprep.subr.mxu0 0.0
    %552 = vmatpush1.msra.mxu0 0.0
    %553 = vmatprep.subr.mxu0 0.0
    %554 = vmatpush1.msra.mxu0 0.0
    %555 = vmatprep.subr.mxu0 0.0
    %556 = vmatpush1.msra.mxu0 0.0
    %557 = vmatprep.subr.mxu0 0.0
    %558 = vmatpush1.msra.mxu0 0.0
    %559 = vmatprep.subr.mxu0 0.0
    %560 = vmatpush1.msra.mxu0 0.0
    %561 = vmatprep.subr.mxu0 0.0
    %562 = vmatpush1.msra.mxu0 0.0
    %563 = vmatprep.subr.mxu0 0.0
    %564 = vmatpush1.msra.mxu0 0.0
    %565 = vmatprep.subr.mxu0 0.0
    %566 = vmatpush1.msra.mxu0 0.0
    %567 = vmatprep.subr.mxu0 0.0
    %568 = vmatpush1.msra.mxu0 0.0
    %569 = vmatprep.subr.mxu0 0.0
    %570 = vmatpush1.msra.mxu0 0.0
    %571 = vmatprep.subr.mxu0 0.0
    %572 = vmatpush1.msra.mxu0 0.0
    %573 = vmatprep.subr.mxu0 0.0
    %574 = vmatpush1.msra.mxu0 0.0
    %575 = vmatprep.subr.mxu0 0.0
    %576 = vmatpush1.msra.mxu0 0.0
    %577 = vmatprep.subr.mxu0 0.0
    %578 = vmatpush1.msra.mxu0 0.0
    %579 = vmatprep.subr.mxu0 0.0
    %580 = vmatpush1.msra.mxu0 0.0
    %581 = vmatprep.subr.mxu0 0.0
    %582 = vmatpush1.msra.mxu0 0.0
    %583 = vmatprep.subr.mxu0 0.0
    %584 = vmatpush1.msra.mxu0 0.0
    %585 = vmatprep.subr.mxu0 0.0
    %586 = vmatpush1.msra.mxu0 0.0
    %587 = vmatprep.subr.mxu0 0.0
    %588 = vmatpush1.msra.mxu0 0.0
    %589 = vmatprep.subr.mxu0 0.0
    %590 = vmatpush1.msra.mxu0 0.0
    %591 = vmatprep.subr.mxu0 0.0
    %592 = vmatpush1.msra.mxu0 0.0
    %593 = vmatprep.subr.mxu0 0.0
    %594 = vmatpush1.msra.mxu0 0.0
    %595 = vmatprep.subr.mxu0 0.0
    %596 = vmatpush1.msra.mxu0 0.0
    %597 = vmatprep.subr.mxu0 0.0
    %598 = vmatpush1.msra.mxu0 0.0
    %599 = vmatprep.mubr.f32.mxu0 0.0
    %600 = vmatmul.mubr.f32.gmra.mrb[0].mxu0 %v533
    %v601 = vpop.f32.mrb[0].mxu0
    %v602 = vadd.f32 %v532, %v601
    %v603 = vpop.f32.mrb[0].mxu0
    %604 = vdwg.mxu0
    %v605 = vld [vmem:[%s8 + $0x1] sm:$0x1]
    %v608 = vunpack.c.l.s4 1966171168
    %v609 = vunpack.c.0.s8 %v608
    %v610 = vlaneseq
    %v611 = vshrl.u32 %v610, 7
    %v612 = vsub.s32 %v609, %v611
    %v613 = vrot.slane %v602, %v612
    %v614 = vcombine.high %v613, %v613
    %v616 = vunpack.c.l.s4 1966171168
    %v617 = vunpack.c.0.s8 %v616
    %v618 = vlaneseq
    %v619 = vshrl.u32 %v618, 7
    %v620 = vsub.s32 %v617, %v619
    %v621 = vrot.slane %v613, %v620
    %v623 = vunpack.c.l.s4 1966171168
    %v624 = vunpack.c.0.s8 %v623
    %v625 = vlaneseq
    %v626 = vshrl.u32 %v625, 7
    %v627 = vsub.s32 %v624, %v626
    %v628 = vrot.slane %v614, %v627
    %v629 = vld [vmem:[#allocation9] sm:$0xff]
    %v630 = vld [vmem:[#allocation9 + $0x8] sm:$0xff]
    %v631 = vlaneseq
    %v632 = vshrl.u32 %v631, 7
    %v633 = vsub.s32 0, %v632
    %v634 = vrot.slane %v621, %v633
    %v635 = vlaneseq
    %v636 = vshrl.u32 %v635, 7
    %v637 = vsub.s32 0, %v636
    %v638 = vrot.slane %v628, %v637
    %v641 = vadd.f32 %v634, %v629
    %v642 = vadd.f32 %v638, %v630
    %v643 = vtanh.pop %v641
    %v644 = vtanh.pop %v642
    %v645 = vlaneseq
    %v646 = vshrl.u32 %v645, 7
    %v647 = vsub.s32 0, %v646
    %v648 = vrot.slane %v605, %v647
    %v649 = vmul.f32 %v648, %v643
    %v650 = vmul.f32 %v648, %v644
    %v651 = vsel %vm131, %v649, 0.0
    %652 = vadd.xlane.f32.xlu0 %v651
    %v653 = vpop.xlane.xlu0 %652
    %v654 = vsel %vm131, %v650, 0.0
    %655 = vadd.xlane.f32.xlu0 %v654
    %v656 = vpop.xlane.xlu0 %655
    %v657 = vtanh.pop %v653
    %v658 = vtanh.pop %v656
    %v659 = vmul.f32 %v657, 10.0
    %v660 = vmul.f32 %v658, 10.0
    %v661 = vld [vmem:[%s3] sm:$0x3]
    %v662 = vmul.f32 %v661, -1e+30
    %v664 = vlaneseq
    %v665 = vshrl.u32 %v664, 7
    %v666 = vsub.s32 0, %v665
    %v667 = vrot.slane %v662, %v666
    %669 = vbcast.lane.b32.xlu0 %v667, 256
    %v670 = vpop.permute.xlu0 %669
    %v671 = vlaneseq
    %v672 = vshrl.u32 %v671, 7
    %v673 = vsub.s32 1, %v672
    %v674 = vrot.slane %v662, %v673
    %676 = vbcast.lane.b32.xlu0 %v674, 256
    %v677 = vpop.permute.xlu0 %676
    %v680 = vadd.f32 %v659, %v670
    %v681 = vadd.f32 %v660, %v677
    %684 = vset.pattern.permute.xlu0 0
    %685 = vperm.xlu0 %684, %v680
    %v686 = vpop.permute.xlu0 %685
    %687 = vset.pattern.permute.xlu0 0
    %688 = vperm.xlu0 %687, %v681
    %v689 = vpop.permute.xlu0 %688
    %v690 = vlaneseq
    %v691 = vand.u32 %v690, 127
    %v692 = vlaneseq
    %v693 = vshrl.u32 %v692, 7
    %v694 = vsub.s32 %v691, %v693
    %v695 = vrot.slane %v686, %v694
    %v696 = vlaneseq
    %v697 = vshrl.u32 %v696, 7
    %v698 = vsub.s32 %v691, %v697
    %v699 = vrot.slane %v689, %v698
    %vm700 = vcmask 1041409
    %v701 = vsel %vm700, %v699, %v695
    %vm703 = vcmask 58368
    %v704 = vsel %vm703, %v701, -inf
    %705 = vmax.xlane.f32.xlu0 %v704
    %v706 = vpop.xlane.xlu0 %705
    %v708 = vlaneseq
    %v709 = vshrl.u32 %v708, 7
    %v710 = vsub.s32 0, %v709
    %v711 = vrot.slane %v706, %v710
    %v712 = vlaneseq
    %v713 = vshrl.u32 %v712, 7
    %v714 = vsub.s32 1, %v713
    %v715 = vrot.slane %v706, %v714
    %v718 = vsub.f32 %v680, %v711
    %v719 = vsub.f32 %v681, %v715
    %v720 = vmul.f32 %v718, 1.442695
    %v721 = vpow.pop %v720
    %v722 = vmul.f32 %v719, 1.442695
    %v723 = vpow.pop %v722
    %726 = vset.pattern.permute.xlu0 0
    %727 = vperm.xlu0 %726, %v721
    %v728 = vpop.permute.xlu0 %727
    %729 = vset.pattern.permute.xlu0 0
    %730 = vperm.xlu0 %729, %v723
    %v731 = vpop.permute.xlu0 %730
    %v732 = vlaneseq
    %v733 = vshrl.u32 %v732, 7
    %v734 = vsub.s32 %v691, %v733
    %v735 = vrot.slane %v728, %v734
    %v736 = vlaneseq
    %v737 = vshrl.u32 %v736, 7
    %v738 = vsub.s32 %v691, %v737
    %v739 = vrot.slane %v731, %v738
    %v740 = vsel %vm700, %v739, %v735
    %v742 = vsel %vm703, %v740, 0.0
    %743 = vadd.xlane.f32.xlu0 %v742
    %v744 = vpop.xlane.xlu0 %743
    %v745 = vrcp.pop %v744
    %v747 = vlaneseq
    %v748 = vshrl.u32 %v747, 7
    %v749 = vsub.s32 0, %v748
    %v750 = vrot.slane %v745, %v749
    %v751 = vlaneseq
    %v752 = vshrl.u32 %v751, 7
    %v753 = vsub.s32 1, %v752
    %v754 = vrot.slane %v745, %v753
    %v757 = vmul.f32 %v721, %v750
    %v758 = vmul.f32 %v723, %v754
    %v759 = vmax.f32 %v757, 1e-08
    %v760 = vmax.f32 %v758, 1e-08
    %763 = vset.pattern.permute.xlu0 0
    %764 = vperm.xlu0 %763, %v759
    %v765 = vpop.permute.xlu0 %764
    %766 = vset.pattern.permute.xlu0 0
    %767 = vperm.xlu0 %766, %v760
    %v768 = vpop.permute.xlu0 %767
    %v769 = vlaneseq
    %v770 = vshrl.u32 %v769, 7
    %v771 = vsub.s32 %v691, %v770
    %v772 = vrot.slane %v765, %v771
    %v773 = vlaneseq
    %v774 = vshrl.u32 %v773, 7
    %v775 = vsub.s32 %v691, %v774
    %v776 = vrot.slane %v768, %v775
    %v777 = vsel %vm700, %v776, %v772
    %779 = vst.msk [vmem:[#allocation12] sm:$0x3] %vm703, %v777
    // Predicated region
    $region68: #{sequential_decoder_supervised_step.1} parent=1 // pred_check
      _
    $region69: #{sequential_decoder_supervised_step.1} parent=1 // pred_check_branch
      %781 = sbr.rel (0) target = $region71
    $region70: #{sequential_decoder_supervised_step.1} parent=1 // pred_region
      %s783 = ssub.s32 32, 32
      %784 = vsyncadd [#allocation6], %s783
      %s786 = sshll.u32 [#allocation12], 4
      %s787 = int_to_ptr.vmem [resolvable:$true] %s786
      %789 = dma.vmem_to_hbm [thread:$0]  %s787, 32, %s9, [#allocation6]
    $region71: #{sequential_decoder_supervised_step.1} parent=1 // pred_fallthru
      _
    // Predicated region
    $region72: #{sequential_decoder_supervised_step.1} parent=1 // pred_check
      _
    $region73: #{sequential_decoder_supervised_step.1} parent=1 // pred_check_branch
      %791 = sbr.rel (0) target = $region75
    $region74: #{sequential_decoder_supervised_step.1} parent=1 // pred_region
      %s793 = ssub.s32 64, 64
      %794 = vsyncadd [#allocation14], %s793
      %s795 = sshll.u32 [#allocation13], 4
      %s796 = int_to_ptr.vmem [resolvable:$true] %s795
      %801 = dma.vmem_to_hbm [thread:$0]  %s796, 64, %s10, [#allocation14], 32, 32, 2
    $region75: #{sequential_decoder_supervised_step.1} parent=1 // pred_fallthru
      _
    // Predicated region
    $region76: #{sequential_decoder_supervised_step.1} parent=1 // pred_check
      _
    $region77: #{sequential_decoder_supervised_step.1} parent=1 // pred_check_branch
      %803 = sbr.rel (0) target = $region79
    $region78: #{sequential_decoder_supervised_step.1} parent=1 // pred_region
      %804 = dma.done [#allocation6], 32
    $region79: #{sequential_decoder_supervised_step.1} parent=1 // pred_fallthru
      _
    // Predicated region
    $region80: #{sequential_decoder_supervised_step.1} parent=1 // pred_check
      _
    $region81: #{sequential_decoder_supervised_step.1} parent=1 // pred_check_branch
      %806 = sbr.rel (0) target = $region83
    $region82: #{sequential_decoder_supervised_step.1} parent=1 // pred_region
      %807 = dma.done [#allocation14], 64
    $region83: #{sequential_decoder_supervised_step.1} parent=1 // pred_fallthru
      _
    %808 = vsyncpa [#allocation5], 1
    %809 = vsyncpa [#allocation10], 1
    %810 = vsyncpa [#allocation6], 1
    %811 = vsyncpa [#allocation14], 1
    %812 = vsyncpa [#allocation7], 1
  %813 = vsyncmov [#allocation3]
  %s814 = vpop.sfrf %813
  %p815 = scmp.eq.s32.totalorder %s814, 0
  %p816 = pneg %p815
  %818 = shalt.err (%p816)
  %s819 = scalar_lea.sflag [#allocation3], 1
  %820 = vsyncmov %s819
  %s821 = vpop.sfrf %820
  %p822 = scmp.eq.s32.totalorder %s821, 0
  %p823 = pneg %p822
  %825 = shalt.err (%p823)

</llo_original>
